<compile_context>
chip_gen: v7x
topology: tpu7x:2x2x1
jax: 0.10.0
libtpu: 0.0.40
codegen_flags: <defaults>
</compile_context>

<pallas_src>
import functools
import math

import jax
import jax.numpy as jnp
from jax import lax
from jax.experimental import pallas as pl
from jax.experimental.pallas import tpu as pltpu


def _round_up(x, m):
    return ((x + m - 1) // m) * m


def dqn_kernel(x_ref, w1_ref, b1_ref, wh_ref, bh_ref, q_ref, *,
               action_dim, a_pack, groups):
    # x_ref:  (TB, S)           f32  (cast to bf16 in-kernel, no wrapper pass)
    # w1_ref: (S, H_pad)        bf16 (zero-padded columns)
    # b1_ref: (1, H_pad)        f32
    # wh_ref: (H_pad, P)        bf16 cols [0,action_dim)=advantage, col action_dim=value
    # bh_ref: (1, P)            f32
    # q_ref:  (TB//groups, 128) f32  packed Q   (or (TB, P) when groups == 1)
    x = x_ref[...].astype(w1_ref.dtype)

    # fc1 + relu (f32 accumulation, f32 elementwise — v5e-safe).
    h = jnp.dot(x, w1_ref[...], preferred_element_type=jnp.float32) + b1_ref[...]
    h = jnp.maximum(h, 0.0)

    # Fused value+advantage head: one MXU matmul over the 128-lane padded width.
    head = jnp.dot(h.astype(wh_ref.dtype), wh_ref[...],
                   preferred_element_type=jnp.float32) + bh_ref[...]

    # Dueling combine.  Mask out padded lanes (and the V column) before the
    # mean so the row-mean is taken over exactly action_dim entries.
    tb, P = head.shape
    col = lax.broadcasted_iota(jnp.int32, (1, P), 1)
    a_mask = col < action_dim
    a_sum = jnp.sum(jnp.where(a_mask, head, 0.0), axis=1, keepdims=True)
    a_mean = a_sum * (1.0 / action_dim)
    V = head[:, action_dim:action_dim + 1]                    # (TB, 1)
    q = head + (V - a_mean)                                   # one broadcast add
    q = jnp.where(a_mask, q, 0.0)                             # zero junk lanes

    if groups == 1:
        # Fallback (large action spaces): lane-padded store, valid in [0, action_dim).
        q_ref[...] = q
        return

    # Pack `groups` batch rows into one 128-lane output row so the HBM
    # writeback carries only useful bytes and its row-major flattening equals Q:
    #   z[i, c]   = q[i, c % a_pack]              (exact 0/1 matmul; MXU is idle)
    #   out[r, c] = z[groups*r + c//a_pack, c]    (masked sublane reduction)
    k_idx = lax.broadcasted_iota(jnp.int32, (P, 128), 0)
    c_idx = lax.broadcasted_iota(jnp.int32, (P, 128), 1)
    spread = ((c_idx & (a_pack - 1)) == k_idx) & (k_idx < action_dim)
    z = jnp.dot(q, spread.astype(jnp.float32),
                preferred_element_type=jnp.float32)            # (TB, 128)

    shift = a_pack.bit_length() - 1                            # log2(a_pack)
    z3 = z.reshape(tb // groups, groups, 128)
    g_idx = lax.broadcasted_iota(jnp.int32, (1, groups, 128), 1)
    c3 = lax.broadcasted_iota(jnp.int32, (1, groups, 128), 2)
    sel = (c3 >> shift) == g_idx
    # `where` (not multiply) so garbage edge-block rows cannot contaminate
    # valid rows via NaN * 0.
    q_ref[...] = jnp.sum(jnp.where(sel, z3, 0.0), axis=1)


def prepare_dqn_params(params):
    """Pad / fuse / cast the weights ONCE (not on every forward call)."""
    w1, b1, wv, bv, wa, ba = params
    S, H = w1.shape
    action_dim = wa.shape[1]
    LANE = 128
    H_pad = _round_up(H, LANE)
    P = _round_up(action_dim + 1, LANE)

    w1p = jnp.pad(w1, ((0, 0), (0, H_pad - H))).astype(jnp.bfloat16)
    b1p = jnp.pad(b1, ((0, 0), (0, H_pad - H))).astype(jnp.float32)
    # Fused head: advantage columns first, value column last, padded to 128 lanes.
    w_head = jnp.pad(jnp.concatenate([wa, wv], axis=1),
                     ((0, H_pad - H), (0, P - (action_dim + 1)))).astype(jnp.bfloat16)
    b_head = jnp.pad(jnp.concatenate([ba, bv], axis=1),
                     ((0, 0), (0, P - (action_dim + 1)))).astype(jnp.float32)
    return {"w1": w1p, "b1": b1p, "w_head": w_head, "b_head": b_head,
            "action_dim": action_dim}


def dqn_forward(x, prepared, *, block_b=2048):
    """Fused dueling-DQN forward pass as a single Pallas call."""
    w1p, b1p = prepared["w1"], prepared["b1"]
    w_head, b_head = prepared["w_head"], prepared["b_head"]
    action_dim = prepared["action_dim"]

    B, S = x.shape
    assert w1p.shape[0] == S
    H_pad = w1p.shape[1]
    P = w_head.shape[1]

    # Output packing: `groups` rows of next_pow2(action_dim) Q values per
    # 128-lane row.  Pack only while the in-kernel group reshape stays aligned
    # to the 8-row sublane tile (action_dim <= 16); otherwise lane-padded store.
    a_pack = max(8, pl.next_power_of_2(action_dim))
    groups = (128 // a_pack) if a_pack <= 16 else 1
    out_w = 128 if groups > 1 else P

    # Batch tile: big (amortize ~0.35us/step overhead), multiple of 16 (bf16
    # sublane-full) and of `groups` (pack reshape); >=2 grid steps once the
    # batch is large enough to matter (dual-TC v7x).
    align = max(16, groups)
    tb = min(_round_up(block_b, align), _round_up(B, align))
    if B >= 1024:
        tb = min(tb, _round_up((B + 1) // 2, align))
    n_blocks = pl.cdiv(B, tb)
    total_rows = n_blocks * tb
    out_rows = n_blocks * (tb // groups)

    flops = 2 * total_rows * (S * H_pad + H_pad * P)
    if groups > 1:
        flops += 2 * total_rows * P * 128
    bytes_accessed = (B * S * 4 + w1p.size * 2 + b1p.size * 4
                      + w_head.size * 2 + b_head.size * 4
                      + out_rows * out_w * 4)

    kernel = functools.partial(dqn_kernel, action_dim=action_dim,
                               a_pack=a_pack, groups=groups)

    q_pack = pl.pallas_call(
        kernel,
        out_shape=jax.ShapeDtypeStruct((out_rows, out_w), jnp.float32),
        grid_spec=pltpu.PrefetchScalarGridSpec(
            num_scalar_prefetch=0,
            grid=(n_blocks,),
            in_specs=[
                pl.BlockSpec((tb, S), lambda i: (i, 0)),       # x: tiled, f32, unpadded
                pl.BlockSpec((S, H_pad), lambda i: (0, 0)),    # weights: VMEM-resident
                pl.BlockSpec((1, H_pad), lambda i: (0, 0)),
                pl.BlockSpec((H_pad, P), lambda i: (0, 0)),
                pl.BlockSpec((1, P), lambda i: (0, 0)),
            ],
            out_specs=pl.BlockSpec((tb // groups, out_w), lambda i: (i, 0)),
        ),
        compiler_params=pltpu.CompilerParams(
            dimension_semantics=("parallel",)),
        cost_estimate=pl.CostEstimate(
            flops=flops, transcendentals=0, bytes_accessed=bytes_accessed),
    )(x, w1p, b1p, w_head, b_head)

    if groups > 1:
        # Packed rows are exactly Q flattened row-major (a_pack cols per row):
        # the reshape is a flat view; the slice only trims padded rows/lanes.
        return q_pack.reshape(-1, a_pack)[:B, :action_dim]
    return q_pack[:B, :action_dim]


def init_dqn_params(key, state_dim, hidden_dim, action_dim):
    """Deterministic kaiming-uniform-like init (biases zero, as in _init_weights)."""
    k1, k2, k3 = jax.random.split(key, 3)

    def kaiming_uniform(k, fan_in, fan_out):
        # torch kaiming_uniform_(nonlinearity='relu'): bound = sqrt(2)*sqrt(3/fan_in)
        bound = math.sqrt(6.0 / fan_in)
        # stored as (in_dim, out_dim) so the kernel computes x @ W
        return jax.random.uniform(k, (fan_in, fan_out), jnp.float32, -bound, bound)

    w1 = kaiming_uniform(k1, state_dim, hidden_dim)
    b1 = jnp.zeros((1, hidden_dim), jnp.float32)
    wv = kaiming_uniform(k2, hidden_dim, 1)
    bv = jnp.zeros((1, 1), jnp.float32)
    wa = kaiming_uniform(k3, hidden_dim, action_dim)
    ba = jnp.zeros((1, action_dim), jnp.float32)
    return (w1, b1, wv, bv, wa, ba)


def dqn_reference(x, params):
    """Pure-JAX reference with the same bf16-at-the-dot-boundary casting."""
    w1, b1, wv, bv, wa, ba = params
    xb = x.astype(jnp.bfloat16)
    h = jnp.dot(xb, w1.astype(jnp.bfloat16),
                preferred_element_type=jnp.float32) + b1
    h = jnp.maximum(h, 0.0)
    hb = h.astype(jnp.bfloat16)
    V = jnp.dot(hb, wv.astype(jnp.bfloat16),
                preferred_element_type=jnp.float32) + bv
    A = jnp.dot(hb, wa.astype(jnp.bfloat16),
                preferred_element_type=jnp.float32) + ba
    return V + A - jnp.mean(A, axis=1, keepdims=True)


if __name__ == "__main__":
    key = jax.random.PRNGKey(0)
    k_x, k_p = jax.random.split(key)

    batch = 8
    state_dim = 16
    hidden_dim = 32   # hidden_dims=[32]; value_layers / adv_layers are empty
    action_dim = 8

    x = jax.random.normal(k_x, (batch, state_dim), jnp.float32)
    params = init_dqn_params(k_p, state_dim, hidden_dim, action_dim)
    prepared = prepare_dqn_params(params)   # pad/fuse/cast weights once

    q = dqn_forward(x, prepared)
    jax.block_until_ready(q)

    q_ref = dqn_reference(x, params)
    assert q.shape == (batch, action_dim)
    assert jnp.allclose(q, q_ref, atol=1e-4, rtol=1e-4), (
        float(jnp.max(jnp.abs(q - q_ref))))

    print("KERNEL_OK")
</pallas_src>

<mosaic_0001>
module attributes {stable_mosaic.version = 11 : i64} {
  func.func @dqn_kernel(%arg0: i32, %arg1: memref<16x16xf32, #tpu.memory_space<vmem>>, %arg2: memref<16x128xbf16, #tpu.memory_space<vmem>>, %arg3: memref<1x128xf32, #tpu.memory_space<vmem>>, %arg4: memref<128x128xbf16, #tpu.memory_space<vmem>>, %arg5: memref<1x128xf32, #tpu.memory_space<vmem>>, %arg6: memref<1x128xf32, #tpu.memory_space<vmem>>) attributes {dimension_semantics = [#tpu.dimension_semantics<parallel>], iteration_bounds = array<i64: 1>, scalar_prefetch = 0 : i64, scratch_operands = 0 : i64, tpu.core_type = #tpu.core_type<tc>, window_params = [{transform_indices = @transform_0, window_bounds = array<i64: 16, 16>}, {pipeline_mode = #tpu.pipeline_mode<synchronous>, transform_indices = @transform_1, window_bounds = array<i64: 16, 128>}, {pipeline_mode = #tpu.pipeline_mode<synchronous>, transform_indices = @transform_2, window_bounds = array<i64: 1, 128>}, {pipeline_mode = #tpu.pipeline_mode<synchronous>, transform_indices = @transform_3, window_bounds = array<i64: 128, 128>}, {pipeline_mode = #tpu.pipeline_mode<synchronous>, transform_indices = @transform_4, window_bounds = array<i64: 1, 128>}, {transform_indices = @transform_5, window_bounds = array<i64: 1, 128>}]} {
    %c0 = arith.constant 0 : index
    %c0_0 = arith.constant 0 : index
    %0 = vector.load %arg1[%c0, %c0_0] : memref<16x16xf32, #tpu.memory_space<vmem>>, vector<16x16xf32>
    %1 = arith.truncf %0 : vector<16x16xf32> to vector<16x16xbf16>
    %c0_1 = arith.constant 0 : index
    %c0_2 = arith.constant 0 : index
    %2 = vector.load %arg2[%c0_1, %c0_2] : memref<16x128xbf16, #tpu.memory_space<vmem>>, vector<16x128xbf16>
    %cst = arith.constant dense<0.000000e+00> : vector<16x128xf32>
    %3 = tpu.matmul %1, %2, %cst {dimension_numbers = #tpu.dot_dimension_numbers<[1], [0], [0], [1], [0, 0, 1, 1], [], []>} : vector<16x16xbf16>, vector<16x128xbf16>, vector<16x128xf32> -> vector<16x128xf32>
    %c0_3 = arith.constant 0 : index
    %c0_4 = arith.constant 0 : index
    %4 = vector.load %arg3[%c0_3, %c0_4] : memref<1x128xf32, #tpu.memory_space<vmem>>, vector<1x128xf32>
    %5 = vector.broadcast %4 : vector<1x128xf32> to vector<16x128xf32>
    %6 = arith.addf %3, %5 : vector<16x128xf32>
    %cst_5 = arith.constant 0.000000e+00 : f32
    %7 = vector.broadcast %cst_5 : f32 to vector<16x128xf32>
    %8 = arith.maximumf %6, %7 : vector<16x128xf32>
    %9 = arith.truncf %8 : vector<16x128xf32> to vector<16x128xbf16>
    %c0_6 = arith.constant 0 : index
    %c0_7 = arith.constant 0 : index
    %10 = vector.load %arg4[%c0_6, %c0_7] : memref<128x128xbf16, #tpu.memory_space<vmem>>, vector<128x128xbf16>
    %cst_8 = arith.constant dense<0.000000e+00> : vector<16x128xf32>
    %11 = tpu.matmul %9, %10, %cst_8 {dimension_numbers = #tpu.dot_dimension_numbers<[1], [0], [0], [1], [0, 0, 1, 1], [], []>} : vector<16x128xbf16>, vector<128x128xbf16>, vector<16x128xf32> -> vector<16x128xf32>
    %c0_9 = arith.constant 0 : index
    %c0_10 = arith.constant 0 : index
    %12 = vector.load %arg5[%c0_9, %c0_10] : memref<1x128xf32, #tpu.memory_space<vmem>>, vector<1x128xf32>
    %13 = vector.broadcast %12 : vector<1x128xf32> to vector<16x128xf32>
    %14 = arith.addf %11, %13 : vector<16x128xf32>
    %15 = tpu.iota {dimensions = array<i32: 1>} : vector<1x128xi32>
    %c8_i32 = arith.constant 8 : i32
    %16 = vector.broadcast %c8_i32 : i32 to vector<1x128xi32>
    %17 = arith.cmpi slt, %15, %16 : vector<1x128xi32>
    %cst_11 = arith.constant 0.000000e+00 : f32
    %18 = vector.shape_cast %17 : vector<1x128xi1> to vector<1x128xi1>
    %19 = vector.broadcast %18 : vector<1x128xi1> to vector<16x128xi1>
    %20 = vector.broadcast %cst_11 : f32 to vector<16x128xf32>
    %21 = arith.select %19, %14, %20 : vector<16x128xi1>, vector<16x128xf32>
    %cst_12 = arith.constant dense<0.000000e+00> : vector<16xf32>
    %22 = vector.multi_reduction <add>, %21, %cst_12 [1] : vector<16x128xf32> to vector<16xf32>
    %23 = vector.shape_cast %22 : vector<16xf32> to vector<16x1xf32>
    %cst_13 = arith.constant 1.250000e-01 : f32
    %24 = vector.broadcast %cst_13 : f32 to vector<16x1xf32>
    %25 = arith.mulf %23, %24 : vector<16x1xf32>
    %26 = vector.extract_strided_slice %14 {offsets = [0, 8], sizes = [16, 1], strides = [1, 1]} : vector<16x128xf32> to vector<16x1xf32>
    %27 = arith.subf %26, %25 : vector<16x1xf32>
    %28 = vector.broadcast %27 : vector<16x1xf32> to vector<16x128xf32>
    %29 = arith.addf %14, %28 : vector<16x128xf32>
    %cst_14 = arith.constant 0.000000e+00 : f32
    %30 = vector.shape_cast %17 : vector<1x128xi1> to vector<1x128xi1>
    %31 = vector.broadcast %30 : vector<1x128xi1> to vector<16x128xi1>
    %32 = vector.broadcast %cst_14 : f32 to vector<16x128xf32>
    %33 = arith.select %31, %29, %32 : vector<16x128xi1>, vector<16x128xf32>
    %34 = tpu.iota {dimensions = array<i32: 0>} : vector<128x128xi32>
    %35 = tpu.iota {dimensions = array<i32: 1>} : vector<128x128xi32>
    %c7_i32 = arith.constant 7 : i32
    %36 = vector.broadcast %c7_i32 : i32 to vector<128x128xi32>
    %37 = arith.andi %35, %36 : vector<128x128xi32>
    %38 = arith.cmpi eq, %37, %34 : vector<128x128xi32>
    %c8_i32_15 = arith.constant 8 : i32
    %39 = vector.broadcast %c8_i32_15 : i32 to vector<128x128xi32>
    %40 = arith.cmpi slt, %34, %39 : vector<128x128xi32>
    %41 = arith.andi %38, %40 : vector<128x128xi1>
    %42 = arith.extui %41 : vector<128x128xi1> to vector<128x128xi32>
    %43 = arith.sitofp %42 : vector<128x128xi32> to vector<128x128xf32>
    %cst_16 = arith.constant dense<0.000000e+00> : vector<16x128xf32>
    %44 = tpu.matmul %33, %43, %cst_16 {dimension_numbers = #tpu.dot_dimension_numbers<[1], [0], [0], [1], [0, 0, 1, 1], [], []>} : vector<16x128xf32>, vector<128x128xf32>, vector<16x128xf32> -> vector<16x128xf32>
    %45 = vector.shape_cast %44 : vector<16x128xf32> to vector<1x16x128xf32>
    %46 = tpu.iota {dimensions = array<i32: 1>} : vector<1x16x128xi32>
    %47 = tpu.iota {dimensions = array<i32: 2>} : vector<1x16x128xi32>
    %c3_i32 = arith.constant 3 : i32
    %48 = vector.broadcast %c3_i32 : i32 to vector<1x16x128xi32>
    %49 = arith.shrsi %47, %48 : vector<1x16x128xi32>
    %50 = arith.cmpi eq, %49, %46 : vector<1x16x128xi32>
    %cst_17 = arith.constant 0.000000e+00 : f32
    %51 = vector.broadcast %cst_17 : f32 to vector<1x16x128xf32>
    %52 = arith.select %50, %45, %51 : vector<1x16x128xi1>, vector<1x16x128xf32>
    %cst_18 = arith.constant dense<0.000000e+00> : vector<1x128xf32>
    %53 = vector.multi_reduction <add>, %52, %cst_18 [1] : vector<1x16x128xf32> to vector<1x128xf32>
    %c0_19 = arith.constant 0 : index
    %c0_20 = arith.constant 0 : index
    %54 = vector.load %arg6[%c0_19, %c0_20] : memref<1x128xf32, #tpu.memory_space<vmem>>, vector<1x128xf32>
    tpu.vector_store %arg6[%c0_19, %c0_20], %53 {strides = array<i32>} : memref<1x128xf32, #tpu.memory_space<vmem>>, vector<1x128xf32>,
    return
  }
  func.func @transform_0(%arg0: i32) -> (i32, i32) {
    %c0_i32 = arith.constant 0 : i32
    %c0_i32_0 = arith.constant 0 : i32
    return %arg0, %c0_i32 : i32, i32
  }
  func.func @transform_1(%arg0: i32) -> (i32, i32) {
    %c0_i32 = arith.constant 0 : i32
    %c0_i32_0 = arith.constant 0 : i32
    %c0_i32_1 = arith.constant 0 : i32
    return %c0_i32, %c0_i32_0 : i32, i32
  }
  func.func @transform_2(%arg0: i32) -> (i32, i32) {
    %c0_i32 = arith.constant 0 : i32
    %c0_i32_0 = arith.constant 0 : i32
    %c0_i32_1 = arith.constant 0 : i32
    return %c0_i32, %c0_i32_0 : i32, i32
  }
  func.func @transform_3(%arg0: i32) -> (i32, i32) {
    %c0_i32 = arith.constant 0 : i32
    %c0_i32_0 = arith.constant 0 : i32
    %c0_i32_1 = arith.constant 0 : i32
    return %c0_i32, %c0_i32_0 : i32, i32
  }
  func.func @transform_4(%arg0: i32) -> (i32, i32) {
    %c0_i32 = arith.constant 0 : i32
    %c0_i32_0 = arith.constant 0 : i32
    %c0_i32_1 = arith.constant 0 : i32
    return %c0_i32, %c0_i32_0 : i32, i32
  }
  func.func @transform_5(%arg0: i32) -> (i32, i32) {
    %c0_i32 = arith.constant 0 : i32
    %c0_i32_0 = arith.constant 0 : i32
    return %arg0, %c0_i32 : i32, i32
  }
}

</mosaic_0001>

<llo_original>
// kernel: tpu_custom_call.1
$region0: #{tpu_custom_call.1}
  #allocation0 [shape = 'u32[]', space=smem, size = 0x4, offset = 0x4, fixed_abs, tag = 'smem constant byte address 0x4 - core index']
  #allocation1 [shape = 'u32[144,128]{1,0:T(1,128)}', space=vmem, size = 0x12000, scoped, tag = 'internal scratch']
  %s0 = inlined_call_operand.hbm [shape: f32[8,16], index: 0, kind: input, shape index: {}]
  %s1 = inlined_call_operand.hbm [shape: bf16[16,128], index: 1, kind: input, shape index: {}]
  %s2 = inlined_call_operand.vmem [shape: f32[1,128], index: 2, kind: input, shape index: {}]
  %s3 = inlined_call_operand.hbm [shape: bf16[128,128], index: 3, kind: input, shape index: {}]
  %s4 = inlined_call_operand.vmem [shape: f32[1,128], index: 4, kind: input, shape index: {}]
  %s5 = inlined_call_operand.hbm [shape: f32[1,128], index: 5, kind: output, shape index: {}]
  %s6 = sld [smem:[#allocation0]]
  $region42: #{tpu_custom_call.1} parent=0
    _
  %s8 = ssub.s32 1, %s6
  %s9 = scalar_select 0, %s8, %s6
  $region1: #{tpu_custom_call.1} parent=0
    #allocation2 [shape = 'u8[8192]{0}', space=vmem, size = 0x2000, scoped, tag = 'input window, operand 0, single buffered']
    #allocation3 [shape = 's32[1]{0}', space=sflag, size = 0x4, scoped, tag = 'scoped memory for tpu_custom_call.1']
    #allocation4 [shape = 's32[1]{0}', space=sflag, size = 0x4, scoped, tag = 'scoped memory for tpu_custom_call.1']
    #allocation5 [shape = 'u8[4096]{0}', space=vmem, size = 0x1000, scoped, tag = 'input window, operand 1, single buffered']
    #allocation6 [shape = 's32[1]{0}', space=sflag, size = 0x4, scoped, tag = 'scoped memory for tpu_custom_call.1']
    #allocation7 [shape = 'u8[32768]{0}', space=vmem, size = 0x8000, scoped, tag = 'input window, operand 3, single buffered']
    #allocation8 [shape = 'u8[512]{0}', space=vmem, size = 0x400, scoped, tag = 'output window, operand 0, single buffered']
    %10 = vsyncpa [#allocation3], 0
    %11 = vsyncpa [#allocation6], 0
    %12 = vsyncpa [#allocation4], 0
    // Predicated region
    $region2: #{tpu_custom_call.1} parent=1 // pred_check
      _
    $region3: #{tpu_custom_call.1} parent=1 // pred_check_branch
      %14 = sbr.rel (0) target = $region5
    $region4: #{tpu_custom_call.1} parent=1 // pred_region
      %s16 = ssub.s32 256, 128
      %17 = vsyncadd [#allocation3], %s16
      %s18 = sshll.u32 [#allocation2], 4
      %s19 = int_to_ptr.vmem [resolvable:$true] %s18
      %24 = dma.hbm_to_vmem [thread:$0]  %s0, 128, %s19, [#allocation3], 128, 128, 8
    $region5: #{tpu_custom_call.1} parent=1 // pred_fallthru
      _
    // Predicated region
    $region6: #{tpu_custom_call.1} parent=1 // pred_check
      _
    $region7: #{tpu_custom_call.1} parent=1 // pred_check_branch
      %26 = sbr.rel (0) target = $region9
    $region8: #{tpu_custom_call.1} parent=1 // pred_region
      %s28 = ssub.s32 128, 128
      %29 = vsyncadd [#allocation6], %s28
      %s30 = sshll.u32 [#allocation5], 4
      %s31 = int_to_ptr.vmem [resolvable:$true] %s30
      %36 = dma.hbm_to_vmem [thread:$0]  %s1, 128, %s31, [#allocation6], 64, 64, 4
    $region9: #{tpu_custom_call.1} parent=1 // pred_fallthru
      _
    // Predicated region
    $region10: #{tpu_custom_call.1} parent=1 // pred_check
      _
    $region11: #{tpu_custom_call.1} parent=1 // pred_check_branch
      %38 = sbr.rel (0) target = $region13
    $region12: #{tpu_custom_call.1} parent=1 // pred_region
      _
    $region13: #{tpu_custom_call.1} parent=1 // pred_fallthru
      _
    // Predicated region
    $region14: #{tpu_custom_call.1} parent=1 // pred_check
      _
    $region15: #{tpu_custom_call.1} parent=1 // pred_check_branch
      %40 = sbr.rel (0) target = $region17
    $region16: #{tpu_custom_call.1} parent=1 // pred_region
      %s42 = ssub.s32 1024, 1024
      %43 = vsyncadd [#allocation6], %s42
      %s44 = sshll.u32 [#allocation7], 4
      %s45 = int_to_ptr.vmem [resolvable:$true] %s44
      %50 = dma.hbm_to_vmem [thread:$0]  %s3, 1024, %s45, [#allocation6], 64, 64, 4
    $region17: #{tpu_custom_call.1} parent=1 // pred_fallthru
      _
    // Predicated region
    $region18: #{tpu_custom_call.1} parent=1 // pred_check
      _
    $region19: #{tpu_custom_call.1} parent=1 // pred_check_branch
      %52 = sbr.rel (0) target = $region21
    $region20: #{tpu_custom_call.1} parent=1 // pred_region
      _
    $region21: #{tpu_custom_call.1} parent=1 // pred_fallthru
      _
    // Predicated region
    $region22: #{tpu_custom_call.1} parent=1 // pred_check
      _
    $region23: #{tpu_custom_call.1} parent=1 // pred_check_branch
      %54 = sbr.rel (0) target = $region25
    $region24: #{tpu_custom_call.1} parent=1 // pred_region
      %55 = dma.done [#allocation3], 256
    $region25: #{tpu_custom_call.1} parent=1 // pred_fallthru
      _
    // Predicated region
    $region26: #{tpu_custom_call.1} parent=1 // pred_check
      _
    $region27: #{tpu_custom_call.1} parent=1 // pred_check_branch
      %57 = sbr.rel (0) target = $region29
    $region28: #{tpu_custom_call.1} parent=1 // pred_region
      %58 = dma.done [#allocation6], 128
    $region29: #{tpu_custom_call.1} parent=1 // pred_fallthru
      _
    // Predicated region
    $region30: #{tpu_custom_call.1} parent=1 // pred_check
      _
    $region31: #{tpu_custom_call.1} parent=1 // pred_check_branch
      %60 = sbr.rel (0) target = $region33
    $region32: #{tpu_custom_call.1} parent=1 // pred_region
      %61 = dma.done [#allocation6], 1024
    $region33: #{tpu_custom_call.1} parent=1 // pred_fallthru
      _
    %v63 = vld [vmem:[#allocation2] sm:$0xff]
    %v64 = vld [vmem:[#allocation2 + $0x8] sm:$0xff]
    %v65 = vpack.c.bf16 %v64, %v63
    %v66 = vld [vmem:[#allocation5] sm:$0xf]
    %v67 = vld [vmem:[#allocation5 + $0x4] sm:$0xf]
    %v68 = vld [vmem:[%s2] sm:$0x1]
    %v70 = vlaneseq
    %v71 = vshrl.u32 %v70, 7
    %v72 = vsub.s32 0, %v71
    %v73 = vrot.slane %v68, %v72
    %v77 = vunpack.c.l.b16 %v66
    %v78 = vunpack.c.l.b16 %v67
    %v79 = vpack.c.b16 %v78, %v77
    %vm81 = vcmask 130048
    %v83 = vsel %vm81, %v65, 0
    %85 = vmatprep.subr.bf16.mxu0 0
    %86 = vmatpush1.bf16.msra.mxu0 %v79
    %87 = vmatprep.subr.bf16.mxu0 0
    %88 = vmatpush1.bf16.msra.mxu0 0
    %89 = vmatprep.subr.bf16.mxu0 0
    %90 = vmatpush1.bf16.msra.mxu0 0
    %91 = vmatprep.subr.bf16.mxu0 0
    %92 = vmatpush1.bf16.msra.mxu0 0
    %93 = vmatprep.subr.bf16.mxu0 0
    %94 = vmatpush1.bf16.msra.mxu0 0
    %95 = vmatprep.subr.bf16.mxu0 0
    %96 = vmatpush1.bf16.msra.mxu0 0
    %97 = vmatprep.subr.bf16.mxu0 0
    %98 = vmatpush1.bf16.msra.mxu0 0
    %99 = vmatprep.subr.bf16.mxu0 0
    %100 = vmatpush1.bf16.msra.mxu0 0
    %101 = vmatprep.subr.bf16.mxu0 0
    %102 = vmatpush1.bf16.msra.mxu0 0
    %103 = vmatprep.subr.bf16.mxu0 0
    %104 = vmatpush1.bf16.msra.mxu0 0
    %105 = vmatprep.subr.bf16.mxu0 0
    %106 = vmatpush1.bf16.msra.mxu0 0
    %107 = vmatprep.subr.bf16.mxu0 0
    %108 = vmatpush1.bf16.msra.mxu0 0
    %109 = vmatprep.subr.bf16.mxu0 0
    %110 = vmatpush1.bf16.msra.mxu0 0
    %111 = vmatprep.subr.bf16.mxu0 0
    %112 = vmatpush1.bf16.msra.mxu0 0
    %113 = vmatprep.subr.bf16.mxu0 0
    %114 = vmatpush1.bf16.msra.mxu0 0
    %115 = vmatprep.subr.bf16.mxu0 0
    %116 = vmatpush1.bf16.msra.mxu0 0
    %117 = vmatprep.mubr.bf16.mxu0 0
    %118 = vmatmul.mubr.bf16.gmra.mrb[0].mxu0 %v83
    %v119 = vpop.f32.mrb[0].mxu0
    %v120 = vadd.f32 %v73, %v119
    %v121 = vpop.f32.mrb[0].mxu0
    %v122 = vpop.f32.mrb[0].mxu0
    %v123 = vadd.f32 %v73, %v122
    %v124 = vpop.f32.mrb[0].mxu0
    %125 = vdwg.mxu0
    %v126 = vmax.f32 %v120, 0.0
    %v127 = vmax.f32 %v123, 0.0
    %v128 = vpack.c.bf16 %v127, %v126
    %v129 = vld [vmem:[#allocation7] sm:$0xf]
    %v130 = vld [vmem:[#allocation7 + $0x4] sm:$0xf]
    %v131 = vld [vmem:[#allocation7 + $0x8] sm:$0xf]
    %v132 = vld [vmem:[#allocation7 + $0xc] sm:$0xf]
    %v133 = vld [vmem:[#allocation7 + $0x10] sm:$0xf]
    %v134 = vld [vmem:[#allocation7 + $0x14] sm:$0xf]
    %v135 = vld [vmem:[#allocation7 + $0x18] sm:$0xf]
    %v136 = vld [vmem:[#allocation7 + $0x1c] sm:$0xf]
    %v137 = vld [vmem:[#allocation7 + $0x20] sm:$0xf]
    %v138 = vld [vmem:[#allocation7 + $0x24] sm:$0xf]
    %v139 = vld [vmem:[#allocation7 + $0x28] sm:$0xf]
    %v140 = vld [vmem:[#allocation7 + $0x2c] sm:$0xf]
    %v141 = vld [vmem:[#allocation7 + $0x30] sm:$0xf]
    %v142 = vld [vmem:[#allocation7 + $0x34] sm:$0xf]
    %v143 = vld [vmem:[#allocation7 + $0x38] sm:$0xf]
    %v144 = vld [vmem:[#allocation7 + $0x3c] sm:$0xf]
    %v145 = vld [vmem:[%s4] sm:$0x1]
    %v147 = vlaneseq
    %v148 = vshrl.u32 %v147, 7
    %v149 = vsub.s32 0, %v148
    %v150 = vrot.slane %v145, %v149
    %v168 = vunpack.c.l.b16 %v129
    %v169 = vunpack.c.l.b16 %v130
    %v170 = vunpack.c.l.b16 %v131
    %v171 = vunpack.c.l.b16 %v132
    %v172 = vunpack.c.l.b16 %v133
    %v173 = vunpack.c.l.b16 %v134
    %v174 = vunpack.c.l.b16 %v135
    %v175 = vunpack.c.l.b16 %v136
    %v176 = vunpack.c.l.b16 %v137
    %v177 = vunpack.c.l.b16 %v138
    %v178 = vunpack.c.l.b16 %v139
    %v179 = vunpack.c.l.b16 %v140
    %v180 = vunpack.c.l.b16 %v141
    %v181 = vunpack.c.l.b16 %v142
    %v182 = vunpack.c.l.b16 %v143
    %v183 = vunpack.c.l.b16 %v144
    %v184 = vpack.c.b16 %v169, %v168
    %v185 = vpack.c.b16 %v171, %v170
    %v186 = vpack.c.b16 %v173, %v172
    %v187 = vpack.c.b16 %v175, %v174
    %v188 = vpack.c.b16 %v177, %v176
    %v189 = vpack.c.b16 %v179, %v178
    %v190 = vpack.c.b16 %v181, %v180
    %v191 = vpack.c.b16 %v183, %v182
    %200 = vmatprep.subr.bf16.mxu0 0
    %201 = vmatpush1.bf16.msra.mxu0 %v184
    %202 = vmatprep.subr.bf16.mxu0 0
    %203 = vmatpush1.bf16.msra.mxu0 %v185
    %204 = vmatprep.subr.bf16.mxu0 0
    %205 = vmatpush1.bf16.msra.mxu0 %v186
    %206 = vmatprep.subr.bf16.mxu0 0
    %207 = vmatpush1.bf16.msra.mxu0 %v187
    %208 = vmatprep.subr.bf16.mxu0 0
    %209 = vmatpush1.bf16.msra.mxu0 %v188
    %210 = vmatprep.subr.bf16.mxu0 0
    %211 = vmatpush1.bf16.msra.mxu0 %v189
    %212 = vmatprep.subr.bf16.mxu0 0
    %213 = vmatpush1.bf16.msra.mxu0 %v190
    %214 = vmatprep.subr.bf16.mxu0 0
    %215 = vmatpush1.bf16.msra.mxu0 %v191
    %216 = vmatprep.subr.bf16.mxu0 0
    %217 = vmatpush1.bf16.msra.mxu0 0
    %218 = vmatprep.subr.bf16.mxu0 0
    %219 = vmatpush1.bf16.msra.mxu0 0
    %220 = vmatprep.subr.bf16.mxu0 0
    %221 = vmatpush1.bf16.msra.mxu0 0
    %222 = vmatprep.subr.bf16.mxu0 0
    %223 = vmatpush1.bf16.msra.mxu0 0
    %224 = vmatprep.subr.bf16.mxu0 0
    %225 = vmatpush1.bf16.msra.mxu0 0
    %226 = vmatprep.subr.bf16.mxu0 0
    %227 = vmatpush1.bf16.msra.mxu0 0
    %228 = vmatprep.subr.bf16.mxu0 0
    %229 = vmatpush1.bf16.msra.mxu0 0
    %230 = vmatprep.subr.bf16.mxu0 0
    %231 = vmatpush1.bf16.msra.mxu0 0
    %232 = vmatprep.mubr.bf16.mxu0 0
    %233 = vmatmul.mubr.bf16.gmra.mrb[0].mxu0 %v128
    %v234 = vpop.f32.mrb[0].mxu0
    %v235 = vadd.f32 %v150, %v234
    %v236 = vpop.f32.mrb[0].mxu0
    %v237 = vpop.f32.mrb[0].mxu0
    %v238 = vadd.f32 %v150, %v237
    %v239 = vpop.f32.mrb[0].mxu0
    %240 = vdwg.mxu0
    %v241 = vlaneseq
    %v242 = vand.u32 %v241, 127
    %vm243 = vcmp.lt.s32.totalorder %v242, 8
    %v244 = vsel %vm243, 1, 0
    %vm245 = vcmp.eq.s32.totalorder %v244, 1
    %v246 = vsel %vm245, %v235, 0.0
    %v247 = vsel %vm245, %v238, 0.0
    %248 = vadd.xlane.f32.xlu0 %v246
    %v249 = vpop.xlane.xlu0 %248
    %250 = vadd.xlane.f32.xlu0 %v247
    %v251 = vpop.xlane.xlu0 %250
    %v252 = vmul.f32 %v249, 0.125
    %v253 = vmul.f32 %v251, 0.125
    %v254 = vsub.f32 %v235, %v252
    %v255 = vsub.f32 %v238, %v253
    %257 = vset.pattern.permute.xlu0 8
    %258 = vperm.xlu0 %257, %v254
    %v259 = vpop.permute.xlu0 %258
    %262 = vset.pattern.permute.xlu0 8
    %263 = vperm.xlu0 %262, %v255
    %v264 = vpop.permute.xlu0 %263
    %v266 = vadd.f32 %v235, %v259
    %v267 = vadd.f32 %v238, %v264
    %v268 = vsel %vm245, %v266, 0.0
    %v269 = vsel %vm245, %v267, 0.0
    %v270 = vlaneseq
    %v271 = vshrl.u32 %v270, 7
    %v272 = vadd.s32 %v271, 8
    %v273 = vadd.s32 %v271, 16
    %v274 = vadd.s32 %v271, 24
    %v275 = vadd.s32 %v271, 32
    %v276 = vadd.s32 %v271, 40
    %v277 = vadd.s32 %v271, 48
    %v278 = vadd.s32 %v271, 56
    %v279 = vadd.s32 %v271, 64
    %v280 = vadd.s32 %v271, 72
    %v281 = vadd.s32 %v271, 80
    %v282 = vadd.s32 %v271, 88
    %v283 = vadd.s32 %v271, 96
    %v284 = vadd.s32 %v271, 104
    %v285 = vadd.s32 %v271, 112
    %v286 = vadd.s32 %v271, 120
    %v287 = vand.u32 %v242, 7
    %vm288 = vcmp.eq.s32.totalorder %v287, %v271
    %vm289 = vcmp.eq.s32.totalorder %v287, %v272
    %vm290 = vcmp.eq.s32.totalorder %v287, %v273
    %vm291 = vcmp.eq.s32.totalorder %v287, %v274
    %vm292 = vcmp.eq.s32.totalorder %v287, %v275
    %vm293 = vcmp.eq.s32.totalorder %v287, %v276
    %vm294 = vcmp.eq.s32.totalorder %v287, %v277
    %vm295 = vcmp.eq.s32.totalorder %v287, %v278
    %vm296 = vcmp.eq.s32.totalorder %v287, %v279
    %vm297 = vcmp.eq.s32.totalorder %v287, %v280
    %vm298 = vcmp.eq.s32.totalorder %v287, %v281
    %vm299 = vcmp.eq.s32.totalorder %v287, %v282
    %vm300 = vcmp.eq.s32.totalorder %v287, %v283
    %vm301 = vcmp.eq.s32.totalorder %v287, %v284
    %vm302 = vcmp.eq.s32.totalorder %v287, %v285
    %vm303 = vcmp.eq.s32.totalorder %v287, %v286
    %vm304 = vcmp.lt.s32.totalorder %v271, 8
    %vm305 = vcmp.lt.s32.totalorder %v272, 8
    %vm306 = vcmp.lt.s32.totalorder %v273, 8
    %vm307 = vcmp.lt.s32.totalorder %v274, 8
    %vm308 = vcmp.lt.s32.totalorder %v275, 8
    %vm309 = vcmp.lt.s32.totalorder %v276, 8
    %vm310 = vcmp.lt.s32.totalorder %v277, 8
    %vm311 = vcmp.lt.s32.totalorder %v278, 8
    %vm312 = vcmp.lt.s32.totalorder %v279, 8
    %vm313 = vcmp.lt.s32.totalorder %v280, 8
    %vm314 = vcmp.lt.s32.totalorder %v281, 8
    %vm315 = vcmp.lt.s32.totalorder %v282, 8
    %vm316 = vcmp.lt.s32.totalorder %v283, 8
    %vm317 = vcmp.lt.s32.totalorder %v284, 8
    %vm318 = vcmp.lt.s32.totalorder %v285, 8
    %vm319 = vcmp.lt.s32.totalorder %v286, 8
    %vm320 = vmand %vm288, %vm304
    %vm321 = vmand %vm289, %vm305
    %vm322 = vmand %vm290, %vm306
    %vm323 = vmand %vm291, %vm307
    %vm324 = vmand %vm292, %vm308
    %vm325 = vmand %vm293, %vm309
    %vm326 = vmand %vm294, %vm310
    %vm327 = vmand %vm295, %vm311
    %vm328 = vmand %vm296, %vm312
    %vm329 = vmand %vm297, %vm313
    %vm330 = vmand %vm298, %vm314
    %vm331 = vmand %vm299, %vm315
    %vm332 = vmand %vm300, %vm316
    %vm333 = vmand %vm301, %vm317
    %vm334 = vmand %vm302, %vm318
    %vm335 = vmand %vm303, %vm319
    %v336 = vsel %vm320, 1, 0
    %v337 = vsel %vm321, 1, 0
    %v338 = vsel %vm322, 1, 0
    %v339 = vsel %vm323, 1, 0
    %v340 = vsel %vm324, 1, 0
    %v341 = vsel %vm325, 1, 0
    %v342 = vsel %vm326, 1, 0
    %v343 = vsel %vm327, 1, 0
    %v344 = vsel %vm328, 1, 0
    %v345 = vsel %vm329, 1, 0
    %v346 = vsel %vm330, 1, 0
    %v347 = vsel %vm331, 1, 0
    %v348 = vsel %vm332, 1, 0
    %v349 = vsel %vm333, 1, 0
    %v350 = vsel %vm334, 1, 0
    %v351 = vsel %vm335, 1, 0
    %v352 = vcvt.s32.f32 %v336
    %v353 = vcvt.s32.f32 %v337
    %v354 = vcvt.s32.f32 %v338
    %v355 = vcvt.s32.f32 %v339
    %v356 = vcvt.s32.f32 %v340
    %v357 = vcvt.s32.f32 %v341
    %v358 = vcvt.s32.f32 %v342
    %v359 = vcvt.s32.f32 %v343
    %v360 = vcvt.s32.f32 %v344
    %v361 = vcvt.s32.f32 %v345
    %v362 = vcvt.s32.f32 %v346
    %v363 = vcvt.s32.f32 %v347
    %v364 = vcvt.s32.f32 %v348
    %v365 = vcvt.s32.f32 %v349
    %v366 = vcvt.s32.f32 %v350
    %v367 = vcvt.s32.f32 %v351
    %368 = vmatprep.subr.mxu0 0.0
    %369 = vmatpush1.msra.mxu0 %v352
    %370 = vmatprep.subr.mxu0 0.0
    %371 = vmatpush1.msra.mxu0 %v353
    %372 = vmatprep.subr.mxu0 0.0
    %373 = vmatpush1.msra.mxu0 %v354
    %374 = vmatprep.subr.mxu0 0.0
    %375 = vmatpush1.msra.mxu0 %v355
    %376 = vmatprep.subr.mxu0 0.0
    %377 = vmatpush1.msra.mxu0 %v356
    %378 = vmatprep.subr.mxu0 0.0
    %379 = vmatpush1.msra.mxu0 %v357
    %380 = vmatprep.subr.mxu0 0.0
    %381 = vmatpush1.msra.mxu0 %v358
    %382 = vmatprep.subr.mxu0 0.0
    %383 = vmatpush1.msra.mxu0 %v359
    %384 = vmatprep.subr.mxu0 0.0
    %385 = vmatpush1.msra.mxu0 %v360
    %386 = vmatprep.subr.mxu0 0.0
    %387 = vmatpush1.msra.mxu0 %v361
    %388 = vmatprep.subr.mxu0 0.0
    %389 = vmatpush1.msra.mxu0 %v362
    %390 = vmatprep.subr.mxu0 0.0
    %391 = vmatpush1.msra.mxu0 %v363
    %392 = vmatprep.subr.mxu0 0.0
    %393 = vmatpush1.msra.mxu0 %v364
    %394 = vmatprep.subr.mxu0 0.0
    %395 = vmatpush1.msra.mxu0 %v365
    %396 = vmatprep.subr.mxu0 0.0
    %397 = vmatpush1.msra.mxu0 %v366
    %398 = vmatprep.subr.mxu0 0.0
    %399 = vmatpush1.msra.mxu0 %v367
    %400 = vmatprep.subr.mxu0 0.0
    %401 = vmatpush1.msra.mxu0 0.0
    %402 = vmatprep.subr.mxu0 0.0
    %403 = vmatpush1.msra.mxu0 0.0
    %404 = vmatprep.subr.mxu0 0.0
    %405 = vmatpush1.msra.mxu0 0.0
    %406 = vmatprep.subr.mxu0 0.0
    %407 = vmatpush1.msra.mxu0 0.0
    %408 = vmatprep.subr.mxu0 0.0
    %409 = vmatpush1.msra.mxu0 0.0
    %410 = vmatprep.subr.mxu0 0.0
    %411 = vmatpush1.msra.mxu0 0.0
    %412 = vmatprep.subr.mxu0 0.0
    %413 = vmatpush1.msra.mxu0 0.0
    %414 = vmatprep.subr.mxu0 0.0
    %415 = vmatpush1.msra.mxu0 0.0
    %416 = vmatprep.subr.mxu0 0.0
    %417 = vmatpush1.msra.mxu0 0.0
    %418 = vmatprep.subr.mxu0 0.0
    %419 = vmatpush1.msra.mxu0 0.0
    %420 = vmatprep.subr.mxu0 0.0
    %421 = vmatpush1.msra.mxu0 0.0
    %422 = vmatprep.subr.mxu0 0.0
    %423 = vmatpush1.msra.mxu0 0.0
    %424 = vmatprep.subr.mxu0 0.0
    %425 = vmatpush1.msra.mxu0 0.0
    %426 = vmatprep.subr.mxu0 0.0
    %427 = vmatpush1.msra.mxu0 0.0
    %428 = vmatprep.subr.mxu0 0.0
    %429 = vmatpush1.msra.mxu0 0.0
    %430 = vmatprep.subr.mxu0 0.0
    %431 = vmatpush1.msra.mxu0 0.0
    %432 = vmatprep.mubr.f32.mxu0 0.0
    %433 = vmatmul.mubr.f32.gmra.mrb[0].mxu0 %v268
    %v434 = vpop.f32.mrb[0].mxu0
    %v435 = vadd.f32 0.0, %v434
    %v436 = vpop.f32.mrb[0].mxu0
    %437 = vmatprep.mubr.f32.mxu0 0.0
    %438 = vmatmul.mubr.f32.gmra.mrb[0].mxu0 %v269
    %v439 = vpop.f32.mrb[0].mxu0
    %v440 = vadd.f32 0.0, %v439
    %v441 = vpop.f32.mrb[0].mxu0
    %442 = vdwg.mxu0
    %v443 = vshra.s32 %v242, 3
    %vm444 = vcmp.eq.s32.totalorder %v443, %v271
    %vm445 = vcmp.eq.s32.totalorder %v443, %v272
    %v446 = vsel %vm444, %v435, 0.0
    %v447 = vsel %vm445, %v440, 0.0
    %v448 = vadd.f32 %v446, %v447
    %v449 = vrot.slane %v448, 4
    %v450 = vadd.f32 %v448, %v449
    %v451 = vrot.slane %v450, 2
    %v452 = vadd.f32 %v450, %v451
    %v453 = vrot.slane %v452, 1
    %v454 = vadd.f32 %v452, %v453
    %455 = vst [vmem:[#allocation8] sm:$0x1] %v454
    // Predicated region
    $region34: #{tpu_custom_call.1} parent=1 // pred_check
      _
    $region35: #{tpu_custom_call.1} parent=1 // pred_check_branch
      %457 = sbr.rel (0) target = $region37
    $region36: #{tpu_custom_call.1} parent=1 // pred_region
      %s459 = ssub.s32 16, 16
      %460 = vsyncadd [#allocation4], %s459
      %s462 = sshll.u32 [#allocation8], 4
      %s463 = int_to_ptr.vmem [resolvable:$true] %s462
      %465 = dma.vmem_to_hbm [thread:$0]  %s463, 16, %s5, [#allocation4]
    $region37: #{tpu_custom_call.1} parent=1 // pred_fallthru
      _
    // Predicated region
    $region38: #{tpu_custom_call.1} parent=1 // pred_check
      _
    $region39: #{tpu_custom_call.1} parent=1 // pred_check_branch
      %467 = sbr.rel (0) target = $region41
    $region40: #{tpu_custom_call.1} parent=1 // pred_region
      %468 = dma.done [#allocation4], 16
    $region41: #{tpu_custom_call.1} parent=1 // pred_fallthru
      _
    %469 = vsyncpa [#allocation3], 1
    %470 = vsyncpa [#allocation6], 1
    %471 = vsyncpa [#allocation4], 1

</llo_original>
